<compile_context>
chip_gen: v6e
topology: v6e:2x2x1
jax: 0.10.0
libtpu: 0.0.40
codegen_flags: <defaults>
</compile_context>

<pallas_src>
import functools

import jax
import jax.numpy as jnp
from jax.experimental import pallas as pl
from jax.experimental.pallas import tpu as pltpu

_MIB = 1024 * 1024


def _vmem_capacity_bytes() -> int:
    """Physical VMEM of the local TPU generation; conservative (v7x) fallback."""
    try:
        cap = int(pltpu.get_tpu_info().vmem_capacity_bytes)
        if cap > 0:
            return cap
    except Exception:
        pass
    return 64 * _MIB


# ----------------------------- fast path (fits in VMEM) ----------------------


def _pairnorm_fused_kernel(x_ref, o_ref, *, scale: float, n_rows: int):
    """Whole [N, D] array resident in VMEM: one read, one write."""
    x = x_ref[...].astype(jnp.float32)
    col_mean = jnp.mean(x, axis=0, keepdims=True)                 # [1, D]
    xc = x - col_mean                                             # [N, D]
    sumsq = jnp.sum(xc * xc, keepdims=True)                       # [1, 1]
    s = jnp.float32(scale) * jax.lax.rsqrt(
        sumsq / jnp.float32(n_rows) + jnp.float32(1e-6))
    o_ref[...] = (xc * s).astype(o_ref.dtype)


# ----------------------------- tiled two-pass path ---------------------------


def _pairnorm_stats_kernel(x_ref, cnt_ref, mean_ref, m2_ref, *,
                           n_rows: int, tile_rows: int, tiles_per_shard: int,
                           need_mask_path: bool):
    """Pass 1: per-shard streaming stats with Chan/Welford chunk merges.

    Resident f32 accumulators per shard c (TensorCore on v7x):
      cnt_ref  (1,1,1)  rows merged so far
      mean_ref (1,1,D)  per-column running mean
      m2_ref   (1,1,D)  per-column running centered sum of squares
    """
    c = pl.program_id(0)      # shard ("parallel": one per TensorCore on v7x)
    i = pl.program_id(1)      # tile within shard ("arbitrary": sequential)
    tile_idx = c * tiles_per_shard + i

    @pl.when(i == 0)
    def _init():
        cnt_ref[...] = jnp.zeros_like(cnt_ref)
        mean_ref[...] = jnp.zeros_like(mean_ref)
        m2_ref[...] = jnp.zeros_like(m2_ref)

    x = x_ref[...].astype(jnp.float32)                            # [tm, D]

    def merge(m_b, m2_b, n_b):
        # Merge chunk stats (n_b, m_b, m2_b) into the running accumulators.
        n_a = cnt_ref[...]                                        # (1,1,1)
        n_ab = n_a + n_b
        r = n_b / jnp.maximum(n_ab, jnp.float32(1.0))
        m_a = mean_ref[...]                                       # (1,1,D)
        delta = m_b - m_a
        mean_ref[...] = m_a + delta * r
        m2_ref[...] = m2_ref[...] + m2_b + (delta * delta) * (n_a * r)
        cnt_ref[...] = n_ab

    def full_tile():
        m_b = jnp.sum(x, axis=0, keepdims=True) * jnp.float32(1.0 / tile_rows)
        xc = x - m_b
        m2_b = jnp.sum(xc * xc, axis=0, keepdims=True)
        merge(m_b[None], m2_b[None], jnp.float32(tile_rows))

    def masked_tile():
        # Ragged last tile and/or a fully out-of-range duplicate tile.
        start = tile_idx * tile_rows
        row = jax.lax.broadcasted_iota(jnp.int32, x.shape, 0) + start
        valid = row < n_rows
        n_b = jnp.clip(n_rows - start, 0, tile_rows).astype(jnp.float32)
        xz = jnp.where(valid, x, jnp.float32(0.0))
        m_b = jnp.sum(xz, axis=0, keepdims=True) * (
            jnp.float32(1.0) / jnp.maximum(n_b, jnp.float32(1.0)))
        xc = jnp.where(valid, x - m_b, jnp.float32(0.0))
        m2_b = jnp.sum(xc * xc, axis=0, keepdims=True)
        merge(m_b[None], m2_b[None], n_b)

    if need_mask_path:
        # Mask ops (iota/compare/select) only run on the steps that need them.
        needs_mask = (tile_idx + 1) * tile_rows > n_rows
        pl.when(needs_mask)(masked_tile)
        pl.when(jnp.logical_not(needs_mask))(full_tile)
    else:
        full_tile()


def _pairnorm_apply_kernel(mean_ref, s_ref, x_ref, o_ref):
    """Pass 2: out = (x - col_mean) * s fused into one lane-dense store."""
    x = x_ref[...].astype(jnp.float32)
    o_ref[...] = ((x - mean_ref[...]) * s_ref[...]).astype(o_ref.dtype)


# ----------------------------- wrapper ---------------------------------------


def _choose_tile_rows(d: int, capacity: int) -> int:
    # capacity/16 -> 8 MiB tiles on v5e/v6e (128 MiB VMEM), 4 MiB on v7x (64 MiB).
    budget = max(2 * _MIB, capacity // 16)
    tm = budget // max(1, d * 4)
    return max(8, (tm // 8) * 8)


@functools.partial(jax.jit, static_argnames=("scale", "tile_rows", "fastpath_bytes"))
def pairnorm(x: jax.Array, scale: float = 1.0, *,
             tile_rows: int | None = None,
             fastpath_bytes: int | None = None) -> jax.Array:
    """PairNorm forward pass. x: [N, D] -> [N, D] (same dtype as x)."""
    n, d = x.shape
    capacity = _vmem_capacity_bytes()
    vmem_params = dict(vmem_limit_bytes=(capacity * 3) // 4)
    if fastpath_bytes is None:
        fastpath_bytes = capacity // 8      # 16 MiB on v5e/v6e, 8 MiB on v7x

    # ---- fast path: whole f32 working set fits comfortably in VMEM ----------
    if tile_rows is None and n * d * 4 <= fastpath_bytes:
        kernel = functools.partial(_pairnorm_fused_kernel,
                                   scale=float(scale), n_rows=n)
        return pl.pallas_call(
            kernel,
            out_shape=jax.ShapeDtypeStruct((n, d), x.dtype),
            in_specs=[pl.BlockSpec((n, d), lambda: (0, 0))],
            out_specs=pl.BlockSpec((n, d), lambda: (0, 0)),
            compiler_params=pltpu.CompilerParams(**vmem_params),
        )(x)

    # ---- tiled two-pass streaming path ---------------------------------------
    tm = int(tile_rows) if tile_rows is not None else _choose_tile_rows(d, capacity)
    if tm >= n:
        tm = n                      # single full-extent tile: no (8,.) constraint
    else:
        tm = max(8, (tm // 8) * 8)  # second-to-last block dim must be 8-aligned

    n_tiles = pl.cdiv(n, tm)
    n_shards = 2                    # leading "parallel" axis: 2 TCs on v7x
    tps = pl.cdiv(n_tiles, n_shards)
    # Padded rows exist (ragged last tile / duplicate out-of-range tiles)?
    need_mask_path = (n_shards * tps * tm) != n

    def x_stats_map(c, i):
        # Clamp so DMAs for the (rare) fully out-of-range duplicate tile stay in
        # bounds; its rows are masked to zero inside the kernel.
        return (jnp.minimum(c * tps + i, n_tiles - 1), 0)

    stats_kernel = functools.partial(
        _pairnorm_stats_kernel, n_rows=n, tile_rows=tm,
        tiles_per_shard=tps, need_mask_path=need_mask_path)

    # Pass 1: per-shard (count, mean, M2) partials. Reduction axis last.
    cnt, mean_p, m2_p = pl.pallas_call(
        stats_kernel,
        out_shape=(jax.ShapeDtypeStruct((n_shards, 1, 1), jnp.float32),
                   jax.ShapeDtypeStruct((n_shards, 1, d), jnp.float32),
                   jax.ShapeDtypeStruct((n_shards, 1, d), jnp.float32)),
        grid=(n_shards, tps),
        in_specs=[pl.BlockSpec((tm, d), x_stats_map)],
        out_specs=(pl.BlockSpec((1, 1, 1), lambda c, i: (c, 0, 0)),
                   pl.BlockSpec((1, 1, d), lambda c, i: (c, 0, 0)),
                   pl.BlockSpec((1, 1, d), lambda c, i: (c, 0, 0))),
        compiler_params=pltpu.CompilerParams(
            dimension_semantics=("parallel", "arbitrary"), **vmem_params),
    )(x)

    # Combine the two shard accumulators + finalize (tiny [2,D] math in XLA).
    cnt = cnt[:, 0, 0]                                  # (2,)
    mean_p = mean_p[:, 0, :]                            # (2, D)
    m2_p = m2_p[:, 0, :]                                # (2, D)
    n_a, n_b = cnt[0], cnt[1]
    r = n_b / jnp.maximum(n_a + n_b, jnp.float32(1.0))
    delta = mean_p[1] - mean_p[0]
    col_mean = (mean_p[0] + delta * r)[None, :]                       # (1, D)
    m2 = m2_p[0] + m2_p[1] + (delta * delta) * (n_a * r)              # (D,)
    sumsq = jnp.maximum(jnp.sum(m2), jnp.float32(0.0))
    s = jnp.float32(scale) * jax.lax.rsqrt(
        sumsq / jnp.float32(n) + jnp.float32(1e-6))
    s = jnp.reshape(s, (1, 1)).astype(jnp.float32)

    # Pass 2: normalize (embarrassingly parallel over row tiles).
    return pl.pallas_call(
        _pairnorm_apply_kernel,
        out_shape=jax.ShapeDtypeStruct((n, d), x.dtype),
        grid=(n_tiles,),
        in_specs=[pl.BlockSpec((1, d), lambda i: (0, 0)),
                  pl.BlockSpec((1, 1), lambda i: (0, 0)),
                  pl.BlockSpec((tm, d), lambda i: (i, 0))],
        out_specs=pl.BlockSpec((tm, d), lambda i: (i, 0)),
        compiler_params=pltpu.CompilerParams(
            dimension_semantics=("parallel",), **vmem_params),
    )(col_mean, s, x)


# ----------------------------- reference & demo ------------------------------


def pairnorm_ref(x: jax.Array, scale: float = 1.0) -> jax.Array:
    """Pure-JAX reference mirroring the PyTorch module."""
    xf = x.astype(jnp.float32)
    xc = xf - jnp.mean(xf, axis=0, keepdims=True)
    rownorm_mean = jnp.sqrt(jnp.mean(jnp.sum(xc * xc, axis=1) + 1e-6))
    return (scale * xc / rownorm_mean).astype(x.dtype)


if __name__ == "__main__":
    key = jax.random.PRNGKey(0)
    scale = 1.0  # PairNorm(scale=1.0) default

    # 1) Small, module-consistent shape (N=16 nodes, hidden=32): fused fast path.
    x_small = jax.random.normal(key, (16, 32), dtype=jnp.float32)
    out_small = jax.block_until_ready(pairnorm(x_small, scale=scale))
    ref_small = pairnorm_ref(x_small, scale=scale)
    assert out_small.shape == ref_small.shape and out_small.dtype == ref_small.dtype
    assert jnp.allclose(out_small, ref_small, atol=1e-5, rtol=1e-5), \
        "fast-path mismatch vs reference"

    # 2) Tiled two-pass path, even tile count + ragged last tile (200 rows, tm=64).
    key2, key3 = jax.random.split(key)
    x_med = jax.random.normal(key2, (200, 128), dtype=jnp.float32) * 3.0 + 0.5
    out_med = jax.block_until_ready(pairnorm(x_med, scale=scale, tile_rows=64))
    ref_med = pairnorm_ref(x_med, scale=scale)
    assert out_med.shape == ref_med.shape and out_med.dtype == ref_med.dtype
    assert jnp.allclose(out_med, ref_med, atol=1e-5, rtol=1e-4), \
        "tiled-path mismatch vs reference"

    # 3) Tiled path with an odd tile count (exercises the clamped/masked
    #    duplicate tile on the second shard): 200 rows, tm=48 -> 5 tiles.
    x_odd = jax.random.normal(key3, (200, 128), dtype=jnp.float32) * 2.0 - 1.0
    out_odd = jax.block_until_ready(pairnorm(x_odd, scale=scale, tile_rows=48))
    ref_odd = pairnorm_ref(x_odd, scale=scale)
    assert out_odd.shape == ref_odd.shape and out_odd.dtype == ref_odd.dtype
    assert jnp.allclose(out_odd, ref_odd, atol=1e-5, rtol=1e-4), \
        "tiled-path (odd tiles) mismatch vs reference"

    print("KERNEL_OK")
</pallas_src>

<mosaic_0001>
module attributes {stable_mosaic.version = 11 : i64} {
  func.func @_pairnorm_fused_kernel(%arg0: memref<16x32xf32, #tpu.memory_space<vmem>>, %arg1: memref<16x32xf32, #tpu.memory_space<vmem>>) attributes {dimension_semantics = [], scalar_prefetch = 0 : i64, scratch_operands = 0 : i64, tpu.core_type = #tpu.core_type<tc>} {
    %c0 = arith.constant 0 : index
    %c0_0 = arith.constant 0 : index
    %0 = vector.load %arg0[%c0, %c0_0] : memref<16x32xf32, #tpu.memory_space<vmem>>, vector<16x32xf32>
    %cst = arith.constant dense<0.000000e+00> : vector<32xf32>
    %1 = vector.multi_reduction <add>, %0, %cst [0] : vector<16x32xf32> to vector<32xf32>
    %2 = vector.shape_cast %1 : vector<32xf32> to vector<1x32xf32>
    %cst_1 = arith.constant 1.600000e+01 : f32
    %3 = vector.broadcast %cst_1 : f32 to vector<1x32xf32>
    %4 = arith.divf %2, %3 : vector<1x32xf32>
    %5 = vector.broadcast %4 : vector<1x32xf32> to vector<16x32xf32>
    %6 = arith.subf %0, %5 : vector<16x32xf32>
    %7 = arith.mulf %6, %6 : vector<16x32xf32>
    %8 = vector.shape_cast %7 : vector<16x32xf32> to vector<1x16x32xf32>
    %cst_2 = arith.constant dense<0.000000e+00> : vector<1xf32>
    %9 = vector.multi_reduction <add>, %8, %cst_2 [1, 2] : vector<1x16x32xf32> to vector<1xf32>
    %10 = vector.shape_cast %9 : vector<1xf32> to vector<1x1x1xf32>
    %11 = vector.extract %10[0, 0, 0] : f32 from vector<1x1x1xf32>
    %12 = vector.broadcast %11 : f32 to vector<1x1xf32>
    %cst_3 = arith.constant 1.600000e+01 : f32
    %13 = vector.broadcast %cst_3 : f32 to vector<1x1xf32>
    %14 = arith.divf %12, %13 : vector<1x1xf32>
    %cst_4 = arith.constant 9.99999997E-7 : f32
    %15 = vector.broadcast %cst_4 : f32 to vector<1x1xf32>
    %16 = arith.addf %14, %15 : vector<1x1xf32>
    %17 = math.rsqrt %16 : vector<1x1xf32>
    %cst_5 = arith.constant 1.000000e+00 : f32
    %18 = vector.broadcast %cst_5 : f32 to vector<1x1xf32>
    %19 = arith.mulf %18, %17 : vector<1x1xf32>
    %20 = vector.broadcast %19 : vector<1x1xf32> to vector<16x32xf32>
    %21 = arith.mulf %6, %20 : vector<16x32xf32>
    %c0_6 = arith.constant 0 : index
    %c0_7 = arith.constant 0 : index
    %22 = vector.load %arg1[%c0_6, %c0_7] : memref<16x32xf32, #tpu.memory_space<vmem>>, vector<16x32xf32>
    tpu.vector_store %arg1[%c0_6, %c0_7], %21 {strides = array<i32>} : memref<16x32xf32, #tpu.memory_space<vmem>>, vector<16x32xf32>,
    return
  }
}

</mosaic_0001>

<llo_original>
// kernel: pairnorm.1
$region0: #{pairnorm.1}
  #allocation0 [shape = 'u32[]', space=smem, size = 0x4, offset = 0x4, fixed_abs, tag = 'smem constant byte address 0x4 - core index']
  #allocation1 [shape = 'u32[144,128]{1,0:T(1,128)}', space=vmem, size = 0x12000, scoped, tag = 'internal scratch']
  %s0 = inlined_call_operand.hbm [shape: f32[16,32], index: 0, kind: input, shape index: {}]
  %s1 = inlined_call_operand.hbm [shape: f32[16,32], index: 1, kind: output, shape index: {}]
  %s2 = sld [smem:[#allocation0]]
  $region18: #{pairnorm.1} parent=0
    _
  %s4 = ssub.s32 1, %s2
  %s5 = scalar_select 0, %s4, %s2
  $region1: #{pairnorm.1} parent=0
    #allocation2 [shape = 'u8[8192]{0}', space=vmem, size = 0x2000, scoped, tag = 'input window, operand 0, single buffered']
    #allocation3 [shape = 's32[1]{0}', space=sflag, size = 0x4, scoped, tag = 'scoped memory for pairnorm.1']
    #allocation4 [shape = 's32[1]{0}', space=sflag, size = 0x4, scoped, tag = 'scoped memory for pairnorm.1']
    #allocation5 [shape = 'u8[8192]{0}', space=vmem, size = 0x2000, scoped, tag = 'output window, operand 0, single buffered']
    %6 = vsyncpa [#allocation3], 0
    %7 = vsyncpa [#allocation4], 0
    // Predicated region
    $region2: #{pairnorm.1} parent=1 // pred_check
      _
    $region3: #{pairnorm.1} parent=1 // pred_check_branch
      %9 = sbr.rel (0) target = $region5
    $region4: #{pairnorm.1} parent=1 // pred_region
      %s11 = ssub.s32 256, 256
      %12 = vsyncadd [#allocation3], %s11
      %s13 = sshll.u32 [#allocation2], 4
      %s14 = int_to_ptr.vmem [resolvable:$true] %s13
      %19 = dma.hbm_to_vmem [thread:$0]  %s0, 256, %s14, [#allocation3], 128, 128, 8
    $region5: #{pairnorm.1} parent=1 // pred_fallthru
      _
    // Predicated region
    $region6: #{pairnorm.1} parent=1 // pred_check
      _
    $region7: #{pairnorm.1} parent=1 // pred_check_branch
      %21 = sbr.rel (0) target = $region9
    $region8: #{pairnorm.1} parent=1 // pred_region
      %22 = dma.done [#allocation3], 256
    $region9: #{pairnorm.1} parent=1 // pred_fallthru
      _
    %v23 = vld [vmem:[#allocation2] sm:$0xff]
    %v24 = vld [vmem:[#allocation2 + $0x8] sm:$0xff]
    %vm25 = vcmask 261120
    %v26 = vsel %vm25, %v23, 0.0
    %v27 = vsel %vm25, %v24, 0.0
    %v28 = vadd.f32 %v26, %v27
    %v29 = vrot.slane %v28, 4
    %v30 = vadd.f32 %v28, %v29
    %v31 = vrot.slane %v30, 2
    %v32 = vadd.f32 %v30, %v31
    %v33 = vrot.slane %v32, 1
    %v34 = vadd.f32 %v32, %v33
    %v35 = vrcp.pop 16.0
    %v36 = vmul.f32 %v34, %v35
    %v37 = vsub.f32 %v23, %v36
    %v38 = vsub.f32 %v24, %v36
    %v39 = vmul.f32 %v37, %v37
    %v40 = vmul.f32 %v38, %v38
    %v41 = vsel %vm25, %v39, 0.0
    %v42 = vsel %vm25, %v40, 0.0
    %v43 = vadd.f32 %v41, %v42
    %44 = vadd.xlane.f32.xlu0 %v43
    %v45 = vpop.xlane.xlu0 %44
    %v46 = vrot.slane %v45, 4
    %v47 = vadd.f32 %v45, %v46
    %v48 = vrot.slane %v47, 2
    %v49 = vadd.f32 %v47, %v48
    %v50 = vrot.slane %v49, 1
    %v51 = vadd.f32 %v49, %v50
    %s52 = vtos %v51
    %v53 = vstv %s52
    %v54 = vmul.f32 %v53, %v35
    %v55 = vadd.f32 %v54, 1e-06
    %v56 = vrsqrt.pop %v55
    %v57 = vmul.f32 %v37, %v56
    %v58 = vmul.f32 %v38, %v56
    %59 = vst.msk [vmem:[#allocation5] sm:$0xff] %vm25, %v57
    %60 = vst.msk [vmem:[#allocation5 + $0x8] sm:$0xff] %vm25, %v58
    // Predicated region
    $region10: #{pairnorm.1} parent=1 // pred_check
      _
    $region11: #{pairnorm.1} parent=1 // pred_check_branch
      %62 = sbr.rel (0) target = $region13
    $region12: #{pairnorm.1} parent=1 // pred_region
      %s64 = ssub.s32 256, 256
      %65 = vsyncadd [#allocation4], %s64
      %s66 = sshll.u32 [#allocation5], 4
      %s67 = int_to_ptr.vmem [resolvable:$true] %s66
      %72 = dma.vmem_to_hbm [thread:$0]  %s67, 256, %s1, [#allocation4], 128, 128, 8
    $region13: #{pairnorm.1} parent=1 // pred_fallthru
      _
    // Predicated region
    $region14: #{pairnorm.1} parent=1 // pred_check
      _
    $region15: #{pairnorm.1} parent=1 // pred_check_branch
      %74 = sbr.rel (0) target = $region17
    $region16: #{pairnorm.1} parent=1 // pred_region
      %75 = dma.done [#allocation4], 256
    $region17: #{pairnorm.1} parent=1 // pred_fallthru
      _
    %76 = vsyncpa [#allocation3], 1
    %77 = vsyncpa [#allocation4], 1

</llo_original>
